<compile_context>
chip_gen: v5e
topology: v5e:2x2
jax: 0.10.0
libtpu: 0.0.40
codegen_flags: <defaults>
</compile_context>

<pallas_src>
import functools

import jax
import jax.numpy as jnp
from jax.experimental import pallas as pl
from jax.experimental.pallas import tpu as pltpu


def _distill_kl_kernel(ys_ref, yt_ref, out_ref, acc_ref, *, inv_t):
    i = pl.program_id(1)  # inner (batch-tile / reduction) axis

    @pl.when(i == 0)
    def _init():
        acc_ref[...] = jnp.zeros_like(acc_ref)

    ys = ys_ref[...].astype(jnp.float32)
    yt = yt_ref[...].astype(jnp.float32)

    # (y/T) - max(y/T) == (y - max(y)) * (1/T) for T > 0: one multiply each.
    ys_sh = (ys - jnp.max(ys, axis=-1, keepdims=True)) * inv_t
    yt_sh = (yt - jnp.max(yt, axis=-1, keepdims=True)) * inv_t

    # Student: only logsumexp of the shifted/scaled logits is needed.
    lse_s = jnp.log(jnp.sum(jnp.exp(ys_sh), axis=-1, keepdims=True))

    # Teacher: reuse e_t for both the normaliser and p_t (2 exps/elt total).
    e_t = jnp.exp(yt_sh)
    z_t = jnp.sum(e_t, axis=-1, keepdims=True)
    log_z_t = jnp.log(z_t)
    p_t = e_t * (1.0 / z_t)  # exact per-row reciprocal, broadcast multiply

    # KL_row = sum_c p_t*(log p_t - log p_s)
    #        = sum_c p_t*(yt_sh - ys_sh) + (lse_s - log Z_t)   [sum_c p_t = 1]
    # Zero-padded rows give ys_sh == yt_sh == 0 and lse_s == log Z_t -> 0.
    row_kl = (
        jnp.sum(p_t * (yt_sh - ys_sh), axis=-1, keepdims=True)
        + (lse_s - log_z_t)
    )

    # Cheap per-row VPU accumulate; defer the full reduce to the last step.
    acc_ref[...] = acc_ref[...] + row_kl

    @pl.when(i == pl.num_programs(1) - 1)
    def _flush():
        out_ref[0, 0] = jnp.sum(acc_ref[...])


def _round_up(x, m):
    return -(-x // m) * m


def _row_align(dtype):
    # f32 tiles: sublane multiple of 8; bf16/fp8 packed tiles: multiple of 16.
    return 8 if jnp.dtype(dtype).itemsize >= 4 else 16


def _tpu_vmem_capacity_bytes():
    # Best-effort hardware query; conservative fallback (64 MiB) keeps both
    # the tile target and the scoped-VMEM request safe on every generation.
    try:
        info = pltpu.get_tpu_info()
        v = getattr(info, "vmem_capacity_bytes", None)
        if isinstance(v, int) and v > 0:
            return v
    except Exception:
        pass
    return 64 * 1024 * 1024


def _num_tensorcores_per_device():
    # Best-effort query; default to 1 (safe for single-TC v5e/v6e chips).
    try:
        info = pltpu.get_tpu_info()
    except Exception:
        return 1
    for attr in ("num_cores", "core_count", "num_tensorcores", "tensorcore_count"):
        v = getattr(info, attr, None)
        if isinstance(v, int) and v >= 1:
            return v
    return 1


def _pick_tile_rows(batch, classes, dtype, vmem_cap):
    align = _row_align(dtype)
    # Per-input f32 working-tile target: ~2 MiB on 64-MiB-VMEM chips (v7x),
    # ~4 MiB on 128-MiB chips (v5e/v6e).  Budget per tile ~= 2 inputs x 2
    # pipeline buffers + ~6 tile-sized f32 temporaries.
    per_tile_bytes = (
        2 * 1024 * 1024 if vmem_cap <= 64 * 1024 * 1024 else 4 * 1024 * 1024
    )
    target_elems = per_tile_bytes // 4
    tb = max(align, min(4096, target_elems // max(classes, 1)))
    tb = max(align, (tb // align) * align)
    tb = min(tb, _round_up(batch, align))
    return tb


def distill_kl(y_s, y_t, T, *, tile_rows=None, num_splits=None):
    """Pallas implementation of DistillKL.forward.  y_s, y_t: [B, C] logits."""
    assert y_s.shape == y_t.shape and y_s.ndim == 2
    B, C = y_s.shape
    align = _row_align(y_s.dtype)
    vmem_cap = _tpu_vmem_capacity_bytes()

    tb = tile_rows if tile_rows is not None else _pick_tile_rows(B, C, y_s.dtype, vmem_cap)
    tb = max(align, (tb // align) * align)

    n_tiles = -(-B // tb)
    cores = _num_tensorcores_per_device()
    if num_splits is None:
        n_splits = cores if (cores > 1 and n_tiles >= cores) else 1
    else:
        n_splits = max(1, min(int(num_splits), n_tiles))
    tiles_per_split = -(-n_tiles // n_splits)
    b_pad = n_splits * tiles_per_split * tb

    if b_pad != B:
        # Zero rows: p_s == p_t == uniform  ->  KL contribution is exactly 0.
        pad = ((0, b_pad - B), (0, 0))
        y_s = jnp.pad(y_s, pad)
        y_t = jnp.pad(y_t, pad)

    kernel = functools.partial(_distill_kl_kernel, inv_t=1.0 / float(T))

    itemsize = jnp.dtype(y_s.dtype).itemsize
    cost = pl.CostEstimate(
        flops=int(10 * b_pad * C),
        transcendentals=int(2 * b_pad * C),
        bytes_accessed=int(2 * b_pad * C * itemsize + 4 * n_splits),
    )
    # Per-generation scoped-VMEM request: ~48 MiB on 64-MiB chips, 96 MiB on
    # 128-MiB chips.
    vmem_limit = int(min(96 * 1024 * 1024, (vmem_cap * 3) // 4))

    def launch(outer_sem):
        return pl.pallas_call(
            kernel,
            out_shape=jax.ShapeDtypeStruct((n_splits, 1), jnp.float32),
            grid=(n_splits, tiles_per_split),
            in_specs=[
                pl.BlockSpec((tb, C), lambda s, i: (s * tiles_per_split + i, 0)),
                pl.BlockSpec((tb, C), lambda s, i: (s * tiles_per_split + i, 0)),
            ],
            out_specs=pl.BlockSpec(
                (1, 1), lambda s, i: (s, 0), memory_space=pltpu.SMEM
            ),
            scratch_shapes=[pltpu.VMEM((tb, 1), jnp.float32)],
            compiler_params=pltpu.CompilerParams(
                dimension_semantics=(outer_sem, pltpu.ARBITRARY),
                vmem_limit_bytes=vmem_limit,
            ),
            cost_estimate=cost,
        )(y_s, y_t)

    if n_splits > 1 and cores >= n_splits:
        # Real multi-TensorCore chip: shard the outer batch split across TCs.
        try:
            partials = launch(pltpu.CORE_PARALLEL)
        except Exception:
            partials = launch(pltpu.PARALLEL)  # fallback if CORE_PARALLEL rejected
    else:
        partials = launch(pltpu.ARBITRARY)

    # T^2 / B scaling applied exactly once, with the ORIGINAL batch size.
    return jnp.sum(partials) * (float(T) * float(T) / B)


def _reference(y_s, y_t, T):
    # Pure-JAX reference for sanity checking.
    y_s = y_s.astype(jnp.float32)
    y_t = y_t.astype(jnp.float32)
    log_p_s = jax.nn.log_softmax(y_s / T, axis=1)
    log_p_t = jax.nn.log_softmax(y_t / T, axis=1)
    p_t = jnp.exp(log_p_t)
    return jnp.sum(p_t * (log_p_t - log_p_s)) * T * T / y_s.shape[0]


if __name__ == "__main__":
    key = jax.random.PRNGKey(0)
    k1, k2, k3, k4 = jax.random.split(key, 4)
    T = 4.0

    # Case 1: multi-tile streaming accumulation (grid inner axis > 1).
    B1, C1 = 32, 32
    y_s1 = jax.random.normal(k1, (B1, C1), dtype=jnp.float32) * 2.0
    y_t1 = jax.random.normal(k2, (B1, C1), dtype=jnp.float32) * 2.0
    loss1 = jax.block_until_ready(distill_kl(y_s1, y_t1, T, tile_rows=8))
    ref1 = _reference(y_s1, y_t1, T)
    assert jnp.allclose(loss1, ref1, rtol=1e-4, atol=1e-4), (loss1, ref1)

    # Case 2: ragged batch (zero-pad path) with bf16 logits, default tiling.
    B2, C2 = 10, 40
    y_s2 = (jax.random.normal(k3, (B2, C2), dtype=jnp.float32) * 2.0).astype(jnp.bfloat16)
    y_t2 = (jax.random.normal(k4, (B2, C2), dtype=jnp.float32) * 2.0).astype(jnp.bfloat16)
    loss2 = jax.block_until_ready(distill_kl(y_s2, y_t2, T))
    ref2 = _reference(y_s2, y_t2, T)
    assert jnp.allclose(loss2, ref2, rtol=1e-4, atol=1e-4), (loss2, ref2)

    # Case 3: forced 2-way split (exercises per-split init/flush + partial
    # summation; serial on single-TC chips, across TCs when available).
    loss3 = jax.block_until_ready(distill_kl(y_s1, y_t1, T, tile_rows=8, num_splits=2))
    assert jnp.allclose(loss3, ref1, rtol=1e-4, atol=1e-4), (loss3, ref1)

    print("KERNEL_OK")
</pallas_src>

<mosaic_0001>
module attributes {stable_mosaic.version = 11 : i64} {
  func.func @_distill_kl_kernel(%arg0: i32, %arg1: i32, %arg2: memref<8x32xf32, #tpu.memory_space<vmem>>, %arg3: memref<8x32xf32, #tpu.memory_space<vmem>>, %arg4: memref<1x1xf32, #tpu.memory_space<smem>>, %arg5: memref<8x1xf32, #tpu.memory_space<vmem>>) attributes {dimension_semantics = [#tpu.dimension_semantics<arbitrary>, #tpu.dimension_semantics<arbitrary>], iteration_bounds = array<i64: 1, 4>, scalar_prefetch = 0 : i64, scratch_operands = 1 : i64, tpu.core_type = #tpu.core_type<tc>, window_params = [{transform_indices = @transform_0, window_bounds = array<i64: 8, 32>}, {transform_indices = @transform_1, window_bounds = array<i64: 8, 32>}, {transform_indices = @transform_2, window_bounds = array<i64: 1, 1>}]} {
    %c0_i32 = arith.constant 0 : i32
    %0 = arith.cmpi eq, %arg1, %c0_i32 : i32
    %1 = arith.extui %0 : i1 to i32
    %c0_i32_0 = arith.constant 0 : i32
    %2 = arith.cmpi ne, %1, %c0_i32_0 : i32
    scf.if %2 {
      %cst_16 = arith.constant 0.000000e+00 : f32
      %41 = vector.broadcast %cst_16 : f32 to vector<8x1xf32>
      %c0_17 = arith.constant 0 : index
      %c0_18 = arith.constant 0 : index
      %42 = vector.load %arg5[%c0_17, %c0_18] : memref<8x1xf32, #tpu.memory_space<vmem>>, vector<8x1xf32>
      tpu.vector_store %arg5[%c0_17, %c0_18], %41 {strides = array<i32>} : memref<8x1xf32, #tpu.memory_space<vmem>>, vector<8x1xf32>,
    } else {
    }
    %c0 = arith.constant 0 : index
    %c0_1 = arith.constant 0 : index
    %3 = vector.load %arg2[%c0, %c0_1] : memref<8x32xf32, #tpu.memory_space<vmem>>, vector<8x32xf32>
    %c0_2 = arith.constant 0 : index
    %c0_3 = arith.constant 0 : index
    %4 = vector.load %arg3[%c0_2, %c0_3] : memref<8x32xf32, #tpu.memory_space<vmem>>, vector<8x32xf32>
    %cst = arith.constant dense<0xFF800000> : vector<8xf32>
    %5 = vector.multi_reduction <maximumf>, %3, %cst [1] : vector<8x32xf32> to vector<8xf32>
    %6 = vector.shape_cast %5 : vector<8xf32> to vector<8x1xf32>
    %7 = vector.broadcast %6 : vector<8x1xf32> to vector<8x32xf32>
    %8 = arith.subf %3, %7 : vector<8x32xf32>
    %cst_4 = arith.constant 2.500000e-01 : f32
    %9 = vector.broadcast %cst_4 : f32 to vector<8x32xf32>
    %10 = arith.mulf %8, %9 : vector<8x32xf32>
    %cst_5 = arith.constant dense<0xFF800000> : vector<8xf32>
    %11 = vector.multi_reduction <maximumf>, %4, %cst_5 [1] : vector<8x32xf32> to vector<8xf32>
    %12 = vector.shape_cast %11 : vector<8xf32> to vector<8x1xf32>
    %13 = vector.broadcast %12 : vector<8x1xf32> to vector<8x32xf32>
    %14 = arith.subf %4, %13 : vector<8x32xf32>
    %cst_6 = arith.constant 2.500000e-01 : f32
    %15 = vector.broadcast %cst_6 : f32 to vector<8x32xf32>
    %16 = arith.mulf %14, %15 : vector<8x32xf32>
    %17 = math.exp %10 : vector<8x32xf32>
    %cst_7 = arith.constant dense<0.000000e+00> : vector<8xf32>
    %18 = vector.multi_reduction <add>, %17, %cst_7 [1] : vector<8x32xf32> to vector<8xf32>
    %19 = vector.shape_cast %18 : vector<8xf32> to vector<8x1xf32>
    %20 = math.log %19 : vector<8x1xf32>
    %21 = math.exp %16 : vector<8x32xf32>
    %cst_8 = arith.constant dense<0.000000e+00> : vector<8xf32>
    %22 = vector.multi_reduction <add>, %21, %cst_8 [1] : vector<8x32xf32> to vector<8xf32>
    %23 = vector.shape_cast %22 : vector<8xf32> to vector<8x1xf32>
    %24 = math.log %23 : vector<8x1xf32>
    %cst_9 = arith.constant 1.000000e+00 : f32
    %25 = vector.broadcast %cst_9 : f32 to vector<8x1xf32>
    %26 = arith.divf %25, %23 : vector<8x1xf32>
    %27 = vector.broadcast %26 : vector<8x1xf32> to vector<8x32xf32>
    %28 = arith.mulf %21, %27 : vector<8x32xf32>
    %29 = arith.subf %16, %10 : vector<8x32xf32>
    %30 = arith.mulf %28, %29 : vector<8x32xf32>
    %cst_10 = arith.constant dense<0.000000e+00> : vector<8xf32>
    %31 = vector.multi_reduction <add>, %30, %cst_10 [1] : vector<8x32xf32> to vector<8xf32>
    %32 = vector.shape_cast %31 : vector<8xf32> to vector<8x1xf32>
    %33 = arith.subf %20, %24 : vector<8x1xf32>
    %34 = arith.addf %32, %33 : vector<8x1xf32>
    %c0_11 = arith.constant 0 : index
    %c0_12 = arith.constant 0 : index
    %35 = vector.load %arg5[%c0_11, %c0_12] : memref<8x1xf32, #tpu.memory_space<vmem>>, vector<8x1xf32>
    %36 = arith.addf %35, %34 : vector<8x1xf32>
    %c0_13 = arith.constant 0 : index
    %c0_14 = arith.constant 0 : index
    %37 = vector.load %arg5[%c0_13, %c0_14] : memref<8x1xf32, #tpu.memory_space<vmem>>, vector<8x1xf32>
    tpu.vector_store %arg5[%c0_13, %c0_14], %36 {strides = array<i32>} : memref<8x1xf32, #tpu.memory_space<vmem>>, vector<8x1xf32>,
    %c3_i32 = arith.constant 3 : i32
    %38 = arith.cmpi eq, %arg1, %c3_i32 : i32
    %39 = arith.extui %38 : i1 to i32
    %c0_i32_15 = arith.constant 0 : i32
    %40 = arith.cmpi ne, %39, %c0_i32_15 : i32
    scf.if %40 {
      %c0_16 = arith.constant 0 : index
      %c0_17 = arith.constant 0 : index
      %41 = vector.load %arg5[%c0_16, %c0_17] : memref<8x1xf32, #tpu.memory_space<vmem>>, vector<8x1xf32>
      %42 = vector.shape_cast %41 : vector<8x1xf32> to vector<1x8x1xf32>
      %cst_18 = arith.constant dense<0.000000e+00> : vector<1xf32>
      %43 = vector.multi_reduction <add>, %42, %cst_18 [1, 2] : vector<1x8x1xf32> to vector<1xf32>
      %44 = vector.shape_cast %43 : vector<1xf32> to vector<1x1x1xf32>
      %45 = vector.extract %44[0, 0, 0] : f32 from vector<1x1x1xf32>
      %c0_19 = arith.constant 0 : index
      %c0_20 = arith.constant 0 : index
      %46 = memref.load %arg4[%c0_19, %c0_20] : memref<1x1xf32, #tpu.memory_space<smem>>
      memref.store %45, %arg4[%c0_19, %c0_20] : memref<1x1xf32, #tpu.memory_space<smem>>
    } else {
    }
    return
  }
  func.func @transform_0(%arg0: i32, %arg1: i32) -> (i32, i32) {
    %c4_i32 = arith.constant 4 : i32
    %0 = arith.muli %arg0, %c4_i32 : i32
    %1 = arith.addi %0, %arg1 : i32
    %c0_i32 = arith.constant 0 : i32
    %c0_i32_0 = arith.constant 0 : i32
    return %1, %c0_i32 : i32, i32
  }
  func.func @transform_1(%arg0: i32, %arg1: i32) -> (i32, i32) {
    %c4_i32 = arith.constant 4 : i32
    %0 = arith.muli %arg0, %c4_i32 : i32
    %1 = arith.addi %0, %arg1 : i32
    %c0_i32 = arith.constant 0 : i32
    %c0_i32_0 = arith.constant 0 : i32
    return %1, %c0_i32 : i32, i32
  }
  func.func @transform_2(%arg0: i32, %arg1: i32) -> (i32, i32) {
    %c0_i32 = arith.constant 0 : i32
    %c0_i32_0 = arith.constant 0 : i32
    return %arg0, %c0_i32 : i32, i32
  }
}

</mosaic_0001>

<llo_original>
// kernel: tpu_custom_call.1
$region0: #{tpu_custom_call.1}
  #allocation0 [shape = 'u32[]', space=smem, size = 0x4, offset = 0x4, fixed_abs, tag = 'smem constant byte address 0x4 - core index']
  #allocation1 [shape = 'u32[72,128]{1,0:T(1,128)}', space=vmem, size = 0x9000, scoped, tag = 'internal scratch']
  #allocation2 [shape = 'f32[8,1]{1,0:T(8,128)}', space=vmem, size = 0x1000, scoped, tag = 'scratch operand']
  %s0 = inlined_call_operand.hbm [shape: f32[32,32], index: 0, kind: input, shape index: {}]
  %s1 = inlined_call_operand.hbm [shape: f32[32,32], index: 1, kind: input, shape index: {}]
  %s2 = inlined_call_operand.hbm [shape: f32[1,1], index: 2, kind: output, shape index: {}]
  %s3 = sld [smem:[#allocation0]]
  $region57: #{tpu_custom_call.1} parent=0
    _
  %s5 = ssub.s32 1, %s3
  %s6 = scalar_select 0, %s5, %s3
  $region1: #{tpu_custom_call.1} parent=0
    #allocation3 [shape = 'u8[8192]{0}', space=vmem, size = 0x2000, scoped, tag = 'input window, operand 0']
    #allocation4 [shape = 's32[2]{0}', space=sflag, size = 0x8, scoped, tag = 'scoped memory for tpu_custom_call.1']
    #allocation5 [shape = 's32[2]{0}', space=sflag, size = 0x8, scoped, tag = 'scoped memory for tpu_custom_call.1']
    #allocation6 [shape = 'u8[8192]{0}', space=vmem, size = 0x2000, scoped, tag = 'input window, operand 1']
    #allocation7 [shape = 's32[2]{0}', space=sflag, size = 0x8, scoped, tag = 'scoped memory for tpu_custom_call.1']
    #allocation8 [shape = 'u8[512]{0}', space=smem, size = 0x200, scoped, tag = 'output window, operand 0, single buffered']
    %7 = vsyncpa [#allocation4], 0
    %s8 = scalar_lea.sflag [#allocation4], 1
    %9 = vsyncpa %s8, 0
    %10 = vsyncpa [#allocation7], 0
    %s11 = scalar_lea.sflag [#allocation7], 1
    %12 = vsyncpa %s11, 0
    %13 = vsyncpa [#allocation5], 0
    loop: start=0, step=1, limit=6
    $region2: #{tpu_custom_call.1} parent=1 // loop_pre_header
      _
    $region3: #{tpu_custom_call.1} parent=1 // loop_header
      %s15 = sphi 0, %s19
      %p16 = scmp.ge.s32.totalorder %s15, 6
      %s22 = sphi 0, %s34
      %s23 = sphi 0, %s30
      %s24 = sphi 0, %s22
      %s25 = sphi 0, %s23
      %s26 = sphi 0, %s24
      %s27 = sphi 0, %s25
      %s41 = sphi 0, %s43
      %s44 = sphi 0, %s41
      %s45 = sphi 0, %s44
      %s61 = sphi 0, %s45
      %s71 = sphi 0, %s73
      %s74 = sphi 0, %s71
      %s75 = sphi 0, %s74
      %s91 = sphi 0, %s75
      %s97 = sphi 0, %s99
      %s100 = sphi 0, %s97
      %s101 = sphi 0, %s100
      %s117 = sphi 0, %s101
    $region4: #{tpu_custom_call.1} parent=1 // loop_header_branch
      %18 = sbr.rel (%p16) target = $region8
    $region5: #{tpu_custom_call.1} parent=1 // loop_body
      %s20 = ssub.s32 %s15, 1
      %s21 = ssub.s32 %s15, 2
      %s28 = sadd.s32 1, %s23
      %p29 = scmp.ge.s32.totalorder %s28, 4
      %s30 = scalar_select %p29, 0, %s28
      %s31 = sadd.s32 1, %s22
      %s32 = scalar_select %p29, %s31, %s22
      %p33 = scmp.ge.s32.totalorder %s32, 1
      %s34 = scalar_select %p33, 0, %s32
      %s35 = smul.u32 %s22, 4
      %s36 = sadd.s32 %s35, %s23
      %s37 = smul.u32 %s34, 4
      %s38 = sadd.s32 %s37, %s30
      %s39 = ssub.s32 %s36, %s38
      %p40 = scmp.eq.s32.totalorder %s39, 0
      %s42 = sadd.s32 %s41, 1
      %s43 = scalar_select %p40, %s41, %s42
      %p46 = pneg %p40
      %p47 = scmp.eq.s32.totalorder %s15, 3
      %p48 = por %p46, %p47
      %p49 = scmp.ne.s32.totalorder %s41, %s44
      %p50 = scmp.eq.s32.totalorder %s15, 0
      %p51 = por %p49, %p50
      %p52 = scmp.ne.s32.totalorder %s41, %s44
      %p53 = scmp.eq.s32.totalorder %s20, 3
      %p54 = por %p52, %p53
      %p55 = scmp.ne.s32.totalorder %s44, %s45
      %p56 = scmp.eq.s32.totalorder %s20, 0
      %p57 = por %p55, %p56
      %p58 = scmp.ne.s32.totalorder %s44, %s45
      %p59 = scmp.eq.s32.totalorder %s21, 3
      %p60 = por %p58, %p59
      %p62 = scmp.ne.s32.totalorder %s45, %s61
      %p63 = scmp.eq.s32.totalorder %s21, 0
      %p64 = por %p62, %p63
      %s65 = smul.u32 %s22, 4
      %s66 = sadd.s32 %s65, %s23
      %s67 = smul.u32 %s34, 4
      %s68 = sadd.s32 %s67, %s30
      %s69 = ssub.s32 %s66, %s68
      %p70 = scmp.eq.s32.totalorder %s69, 0
      %s72 = sadd.s32 %s71, 1
      %s73 = scalar_select %p70, %s71, %s72
      %p76 = pneg %p70
      %p77 = scmp.eq.s32.totalorder %s15, 3
      %p78 = por %p76, %p77
      %p79 = scmp.ne.s32.totalorder %s71, %s74
      %p80 = scmp.eq.s32.totalorder %s15, 0
      %p81 = por %p79, %p80
      %p82 = scmp.ne.s32.totalorder %s71, %s74
      %p83 = scmp.eq.s32.totalorder %s20, 3
      %p84 = por %p82, %p83
      %p85 = scmp.ne.s32.totalorder %s74, %s75
      %p86 = scmp.eq.s32.totalorder %s20, 0
      %p87 = por %p85, %p86
      %p88 = scmp.ne.s32.totalorder %s74, %s75
      %p89 = scmp.eq.s32.totalorder %s21, 3
      %p90 = por %p88, %p89
      %p92 = scmp.ne.s32.totalorder %s75, %s91
      %p93 = scmp.eq.s32.totalorder %s21, 0
      %p94 = por %p92, %p93
      %s95 = ssub.s32 %s22, %s34
      %p96 = scmp.eq.s32.totalorder %s95, 0
      %s98 = sadd.s32 %s97, 1
      %s99 = scalar_select %p96, %s97, %s98
      %p102 = pneg %p96
      %p103 = scmp.eq.s32.totalorder %s15, 3
      %p104 = por %p102, %p103
      %p105 = scmp.ne.s32.totalorder %s97, %s100
      %p106 = scmp.eq.s32.totalorder %s15, 0
      %p107 = por %p105, %p106
      %p108 = scmp.ne.s32.totalorder %s97, %s100
      %p109 = scmp.eq.s32.totalorder %s20, 3
      %p110 = por %p108, %p109
      %p111 = scmp.ne.s32.totalorder %s100, %s101
      %p112 = scmp.eq.s32.totalorder %s20, 0
      %p113 = por %p111, %p112
      %p114 = scmp.ne.s32.totalorder %s100, %s101
      %p115 = scmp.eq.s32.totalorder %s21, 3
      %p116 = por %p114, %p115
      %p118 = scmp.ne.s32.totalorder %s101, %s117
      %p119 = scmp.eq.s32.totalorder %s21, 0
      %p120 = por %p118, %p119
      %p121 = scmp.le.s32.totalorder 1, %s15
      %p122 = scmp.lt.s32.totalorder %s15, 5
      %p123 = pnand %p121, %p122
      %p124 = pneg %p123
      // Predicated region
      $region9: #{tpu_custom_call.1} parent=5 // pred_check
        _
      $region10: #{tpu_custom_call.1} parent=5 // pred_check_branch
        %126 = sbr.rel (%p123) target = $region12
      $region11: #{tpu_custom_call.1} parent=5 // pred_region
        %s127 = ssub.s32 %s15, 1
      $region12: #{tpu_custom_call.1} parent=5 // pred_fallthru
        _
      %p128 = scmp.lt.s32.totalorder %s15, 4
      // Predicated region
      $region13: #{tpu_custom_call.1} parent=5 // pred_check
        %p129 = pneg %p128
      $region14: #{tpu_custom_call.1} parent=5 // pred_check_branch
        %131 = sbr.rel (%p129) target = $region16
      $region15: #{tpu_custom_call.1} parent=5 // pred_region
        // Predicated region
        $region17: #{tpu_custom_call.1} parent=15 // pred_check
          %p132 = pneg %p51
        $region18: #{tpu_custom_call.1} parent=15 // pred_check_branch
          %134 = sbr.rel (%p132) target = $region20
        $region19: #{tpu_custom_call.1} parent=15 // pred_region
          %s135 = sand.u32 %s41, 1
          %s136 = scalar_lea.sflag [#allocation4], %s135
          %s137 = sand.u32 %s41, 1
          %s138 = smul.addr %s137, 8
          %s139 = scalar_lea.vmem [#allocation3], %s138
          %s140 = smul.u32 %s22, 4
          %s141 = sadd.s32 %s140, %s23
          %143 = vsyncadd %s136, 0
          %s144 = smul.addr %s141, 8
          %s145 = scalar_lea.hbm %s0, %s144
          %s147 = sshll.u32 %s145, 4
          %s148 = int_to_ptr.hbm [resolvable:$true] %s147
          %s149 = sshll.u32 %s139, 4
          %s150 = int_to_ptr.vmem [resolvable:$true] %s149
          %152 = dma.hbm_to_vmem [thread:$0]  %s148, 128, %s150, %s136
        $region20: #{tpu_custom_call.1} parent=15 // pred_fallthru
          _
        // Predicated region
        $region21: #{tpu_custom_call.1} parent=15 // pred_check
          %p153 = pneg %p81
        $region22: #{tpu_custom_call.1} parent=15 // pred_check_branch
          %155 = sbr.rel (%p153) target = $region24
        $region23: #{tpu_custom_call.1} parent=15 // pred_region
          %s156 = sand.u32 %s71, 1
          %s157 = scalar_lea.sflag [#allocation7], %s156
          %s158 = sand.u32 %s71, 1
          %s159 = smul.addr %s158, 8
          %s160 = scalar_lea.vmem [#allocation6], %s159
          %s161 = smul.u32 %s22, 4
          %s162 = sadd.s32 %s161, %s23
          %164 = vsyncadd %s157, 0
          %s165 = smul.addr %s162, 8
          %s166 = scalar_lea.hbm %s1, %s165
          %s168 = sshll.u32 %s166, 4
          %s169 = int_to_ptr.hbm [resolvable:$true] %s168
          %s170 = sshll.u32 %s160, 4
          %s171 = int_to_ptr.vmem [resolvable:$true] %s170
          %173 = dma.hbm_to_vmem [thread:$0]  %s169, 128, %s171, %s157
        $region24: #{tpu_custom_call.1} parent=15 // pred_fallthru
          _
      $region16: #{tpu_custom_call.1} parent=5 // pred_fallthru
        _
      %p174 = scmp.le.s32.totalorder 1, %s15
      %p175 = scmp.lt.s32.totalorder %s15, 5
      %p176 = pnand %p174, %p175
      %p177 = pneg %p176
      // Predicated region
      $region25: #{tpu_custom_call.1} parent=5 // pred_check
        _
      $region26: #{tpu_custom_call.1} parent=5 // pred_check_branch
        %179 = sbr.rel (%p176) target = $region28
      $region27: #{tpu_custom_call.1} parent=5 // pred_region
        %s180 = ssub.s32 %s15, 1
        %s181 = sand.u32 %s44, 1
        %s182 = scalar_lea.sflag [#allocation4], %s181
        %s183 = sand.u32 %s44, 1
        %s184 = smul.addr %s183, 8
        %s185 = scalar_lea.vmem [#allocation3], %s184
        // Predicated region
        $region29: #{tpu_custom_call.1} parent=27 // pred_check
          %p186 = pneg %p57
        $region30: #{tpu_custom_call.1} parent=27 // pred_check_branch
          %188 = sbr.rel (%p186) target = $region32
        $region31: #{tpu_custom_call.1} parent=27 // pred_region
          %190 = dma.done %s182, 128
        $region32: #{tpu_custom_call.1} parent=27 // pred_fallthru
          _
        %s191 = sand.u32 %s74, 1
        %s192 = scalar_lea.sflag [#allocation7], %s191
        %s193 = sand.u32 %s74, 1
        %s194 = smul.addr %s193, 8
        %s195 = scalar_lea.vmem [#allocation6], %s194
        // Predicated region
        $region33: #{tpu_custom_call.1} parent=27 // pred_check
          %p196 = pneg %p87
        $region34: #{tpu_custom_call.1} parent=27 // pred_check_branch
          %198 = sbr.rel (%p196) target = $region36
        $region35: #{tpu_custom_call.1} parent=27 // pred_region
          %200 = dma.done %s192, 128
        $region36: #{tpu_custom_call.1} parent=27 // pred_fallthru
          _
        %s201 = sand.u32 %s44, 1
        %s202 = scalar_lea.sflag [#allocation4], %s201
        %s203 = sand.u32 %s44, 1
        %s204 = smul.addr %s203, 8
        %s205 = scalar_lea.vmem [#allocation3], %s204
        %p206 = pneg %p57
        %p207 = pneg %p54
        %s208 = sand.u32 %s74, 1
        %s209 = scalar_lea.sflag [#allocation7], %s208
        %s210 = sand.u32 %s74, 1
        %s211 = smul.addr %s210, 8
        %s212 = scalar_lea.vmem [#allocation6], %s211
        %p213 = pneg %p87
        %p214 = pneg %p84
        %p215 = pneg %p113
        %p216 = pneg %p110
        %s217 = smul.u32 %s24, 4
        %s218 = sadd.s32 %s217, %s25
        %s219 = smul.u32 %s24, 4
        %s220 = sadd.s32 %s219, %s25
        %p221 = scmp.eq.s32.totalorder %s25, 0
        // Predicated region
        $region37: #{tpu_custom_call.1} parent=27 // pred_check
          %p222 = pneg %p221
        $region38: #{tpu_custom_call.1} parent=27 // pred_check_branch
          %224 = sbr.rel (%p222) target = $region40
        $region39: #{tpu_custom_call.1} parent=27 // pred_region
          %vm225 = vcmask 7168
          %226 = vst.msk [vmem:[#allocation2] sm:$0xff] %vm225, 0.0
        $region40: #{tpu_custom_call.1} parent=27 // pred_fallthru
          _
        %v227 = vld [vmem:[%s185] sm:$0xff]
        %v228 = vld [vmem:[%s195] sm:$0xff]
        %vm229 = vcmask 261120
        %v230 = vsel %vm229, %v227, -inf
        %231 = vmax.xlane.f32.xlu0 %v230
        %v232 = vpop.xlane.xlu0 %231
        %v233 = vsub.f32 %v227, %v232
        %v234 = vmul.f32 %v233, 0.25
        %v235 = vsel %vm229, %v228, -inf
        %236 = vmax.xlane.f32.xlu0 %v235
        %v237 = vpop.xlane.xlu0 %236
        %v238 = vsub.f32 %v228, %v237
        %v239 = vmul.f32 %v238, 0.25
        %v240 = vmul.f32 %v234, 1.442695
        %v241 = vpow.pop %v240
        %v242 = vsel %vm229, %v241, 0.0
        %243 = vadd.xlane.f32.xlu0 %v242
        %v244 = vpop.xlane.xlu0 %243
        %v245 = vlog2.pop %v244
        %v246 = vmul.f32 %v245, 0.6931472
        %v247 = vmul.f32 %v239, 1.442695
        %v248 = vpow.pop %v247
        %v249 = vsel %vm229, %v248, 0.0
        %250 = vadd.xlane.f32.xlu0 %v249
        %v251 = vpop.xlane.xlu0 %250
        %v252 = vlog2.pop %v251
        %v253 = vmul.f32 %v252, 0.6931472
        %v254 = vrcp.pop %v251
        %v255 = vmul.f32 %v251, %v254
        %v256 = vsub.f32 1.0, %v255
        %v257 = vmul.f32 %v254, %v256
        %v258 = vadd.f32 %v254, %v257
        %vm259 = vweird.f32 %v251
        %vm260 = vweird.f32 %v254
        %vm261 = vmor %vm259, %vm260
        %v262 = vsel %vm261, %v254, %v258
        %v263 = vand.u32 2147483647, %v251
        %vm264 = vcmp.eq.f32.partialorder %v263, 8.507059e+37
        %v265 = vand.u32 %v251, 2147483648
        %v266 = vor.u32 1.1754944e-38, %v265
        %v267 = vsel %vm264, %v266, %v262
        %v268 = vmul.f32 1.0, %v267
        %v269 = vmul.f32 %v248, %v268
        %v270 = vsub.f32 %v239, %v234
        %v271 = vmul.f32 %v269, %v270
        %v272 = vsel %vm229, %v271, 0.0
        %273 = vadd.xlane.f32.xlu0 %v272
        %v274 = vpop.xlane.xlu0 %273
        %v275 = vsub.f32 %v246, %v253
        %v276 = vadd.f32 %v274, %v275
        %v277 = vld [vmem:[#allocation2] sm:$0xff]
        %v278 = vadd.f32 %v277, %v276
        %vm279 = vcmask 7168
        %280 = vst.msk [vmem:[#allocation2] sm:$0xff] %vm279, %v278
        %p281 = scmp.eq.s32.totalorder %s25, 3
        // Predicated region
        $region41: #{tpu_custom_call.1} parent=27 // pred_check
          %p282 = pneg %p281
        $region42: #{tpu_custom_call.1} parent=27 // pred_check_branch
          %284 = sbr.rel (%p282) target = $region44
        $region43: #{tpu_custom_call.1} parent=27 // pred_region
          %v285 = vld [vmem:[#allocation2] sm:$0xff]
          %v286 = vsel %vm279, %v285, 0.0
          %287 = vadd.xlane.f32.xlu0 %v286
          %v288 = vpop.xlane.xlu0 %287
          %v289 = vrot.slane %v288, 4
          %v290 = vadd.f32 %v288, %v289
          %v291 = vrot.slane %v290, 2
          %v292 = vadd.f32 %v290, %v291
          %v293 = vrot.slane %v292, 1
          %v294 = vadd.f32 %v292, %v293
          %s295 = vtos %v294
          %s296 = scalar_lea.smem [#allocation8], 0
          %297 = sst [smem:[%s296]] %s295
        $region44: #{tpu_custom_call.1} parent=27 // pred_fallthru
          _
        // Predicated region
        $region45: #{tpu_custom_call.1} parent=27 // pred_check
          %p298 = pneg %p110
        $region46: #{tpu_custom_call.1} parent=27 // pred_check_branch
          %300 = sbr.rel (%p298) target = $region48
        $region47: #{tpu_custom_call.1} parent=27 // pred_region
          %302 = vsyncadd [#allocation5], 0
          %s303 = scalar_lea.hbm %s2, %s24
          %s305 = sshll.u32 %s303, 4
          %s306 = int_to_ptr.hbm [resolvable:$true] %s305
          %308 = dma.smem_to_hbm [#allocation8], 16, %s306, [#allocation5]
        $region48: #{tpu_custom_call.1} parent=27 // pred_fallthru
          _
        // Predicated region
        $region49: #{tpu_custom_call.1} parent=27 // pred_check
          %p309 = pneg %p110
        $region50: #{tpu_custom_call.1} parent=27 // pred_check_branch
          %311 = sbr.rel (%p309) target = $region52
        $region51: #{tpu_custom_call.1} parent=27 // pred_region
          %313 = dma.done [#allocation5], 16
        $region52: #{tpu_custom_call.1} parent=27 // pred_fallthru
          _
        %314 = sfence
      $region28: #{tpu_custom_call.1} parent=5 // pred_fallthru
        _
      %p315 = scmp.le.s32.totalorder 2, %s15
      // Predicated region
      $region53: #{tpu_custom_call.1} parent=5 // pred_check
        %p316 = pneg %p315
      $region54: #{tpu_custom_call.1} parent=5 // pred_check_branch
        %318 = sbr.rel (%p316) target = $region56
      $region55: #{tpu_custom_call.1} parent=5 // pred_region
        %s319 = ssub.s32 %s15, 2
      $region56: #{tpu_custom_call.1} parent=5 // pred_fallthru
        _
    $region6: #{tpu_custom_call.1} parent=1 // loop_footer
      %s19 = sadd.s32 1, %s15
    $region7: #{tpu_custom_call.1} parent=1 // loop_footer_branch
      %14 = sbr.rel target = $region3
    $region8: #{tpu_custom_call.1} parent=1 // loop_exit
      _
    %320 = vsyncpa [#allocation4], 1
    %s321 = scalar_lea.sflag [#allocation4], 1
    %322 = vsyncpa %s321, 1
    %323 = vsyncpa [#allocation7], 1
    %s324 = scalar_lea.sflag [#allocation7], 1
    %325 = vsyncpa %s324, 1
    %326 = vsyncpa [#allocation5], 1
    %s327 = scalar_lea.sflag [#allocation5], 1
    %328 = vsyncpa %s327, 1

</llo_original>
